<compile_context>
chip_gen: v6e
topology: v6e:2x2x1
jax: 0.10.0
libtpu: 0.0.40
codegen_flags: <defaults>
</compile_context>

<pallas_src>
import functools

import jax
import jax.numpy as jnp
from jax.experimental import pallas as pl
from jax.experimental.pallas import tpu as pltpu

_LANE = 512          # lane-dense last dim (multiple of 128)
_BLOCK_ROWS = 4096   # (4096, 512) f32 block = 8 MiB per buffer (power of two)


@functools.lru_cache(maxsize=1)
def _vmem_budget():
    """Generation-aware (scoped_vmem_limit, fused_slab_cap) in bytes."""
    cap = 64 << 20  # conservative fallback = v7x physical VMEM
    try:
        info_fn = getattr(pltpu, "get_tpu_info", None)
        if info_fn is not None:
            cap = int(getattr(info_fn(), "vmem_capacity_bytes", cap))
    except Exception:
        pass
    # ~48 MiB scoped limit on v7x (64 MiB phys), ~112 MiB on v5e/v6e (128 MiB).
    vmem_limit = min(max(cap - (16 << 20), 32 << 20), 112 << 20)
    # Fused path budget: input slab + output slab + f32 temps must fit.
    fused_cap = vmem_limit // 4
    return vmem_limit, fused_cap


def _fused_kernel(x_ref, o_ref, *, inv_n):
    # Single VMEM-resident block: reduce + broadcast-subtract, 1 read + 1 write.
    x = x_ref[...].astype(jnp.float32)
    lane_sum = jnp.sum(x, axis=-1, keepdims=True)      # cross-lane reduce
    total = jnp.sum(lane_sum, axis=0, keepdims=True)   # tiny sublane reduce
    o_ref[...] = (x - total * inv_n).astype(o_ref.dtype)


def _rowgroup_sum(x):
    """(R, L) f32 -> (8, L) partial sums using only tile-aligned VPU adds."""
    r = x.shape[0]
    while r > 8:
        r //= 2
        x = x[:r, :] + x[r:2 * r, :]
    return x


def _partial_sum_kernel(x_ref, psum_ref, *, block_rows, valid_rows):
    # Pass 1: each grid step writes its own (8, _LANE) partial sum block.
    x = x_ref[...].astype(jnp.float32)
    if valid_rows % block_rows != 0:  # static: only compiled for ragged tails
        row0 = pl.program_id(0) * block_rows
        row = jax.lax.broadcasted_iota(jnp.int32, (block_rows, 1), 0) + row0
        x = jnp.where(row < valid_rows, x, 0.0)
    psum_ref[...] = _rowgroup_sum(x)


def _subtract_kernel(mean_ref, x_ref, o_ref):
    # Pass 2: tiled elementwise subtract; mean arrives as an SMEM scalar.
    m = mean_ref[0]
    o_ref[...] = (x_ref[...].astype(jnp.float32) - m).astype(o_ref.dtype)


@jax.jit
def my_layer(x):
    """Pallas equivalent of MyLayer.forward: x - x.mean()."""
    n = x.size
    orig_shape = x.shape
    out_dtype = x.dtype
    vmem_limit, fused_cap = _vmem_budget()

    # --- layout plumbing: flatten to a lane-dense (rows, _LANE) slab ---------
    flat = jnp.reshape(x, (-1,))
    rem = n % _LANE
    if rem:
        # Rare (non-lane-aligned element count): <=511 zeros; zero padding is
        # sum-neutral and the mean divides by the true n.
        flat = jnp.pad(flat, (0, _LANE - rem))
    rows = flat.size // _LANE
    x2d = flat.reshape(rows, _LANE)
    inv_n = 1.0 / float(n)

    if rows * _LANE * 4 <= fused_cap:
        # Fused path: one HBM read + one HBM write (2N bytes of traffic).
        out2d = pl.pallas_call(
            functools.partial(_fused_kernel, inv_n=inv_n),
            out_shape=jax.ShapeDtypeStruct((rows, _LANE), out_dtype),
            in_specs=[pl.BlockSpec((rows, _LANE), lambda: (0, 0))],
            out_specs=pl.BlockSpec((rows, _LANE), lambda: (0, 0)),
            compiler_params=pltpu.CompilerParams(vmem_limit_bytes=vmem_limit),
        )(x2d)
    else:
        num_blocks = pl.cdiv(rows, _BLOCK_ROWS)

        # Pass 1: fully parallel per-block partial sums (no resident
        # accumulator), so v7x's two TensorCores both stream the reduction.
        partials = pl.pallas_call(
            functools.partial(_partial_sum_kernel,
                              block_rows=_BLOCK_ROWS, valid_rows=rows),
            out_shape=jax.ShapeDtypeStruct((num_blocks * 8, _LANE), jnp.float32),
            grid=(num_blocks,),
            in_specs=[pl.BlockSpec((_BLOCK_ROWS, _LANE), lambda i: (i, 0))],
            out_specs=pl.BlockSpec((8, _LANE), lambda i: (i, 0)),
            compiler_params=pltpu.CompilerParams(
                dimension_semantics=("parallel",),
                vmem_limit_bytes=vmem_limit),
        )(x2d)

        mean = (jnp.sum(partials) * jnp.float32(inv_n)).reshape(1)  # f32 scalar

        # Pass 2: tiled broadcast-subtract; "parallel" lets megacore split it.
        out2d = pl.pallas_call(
            _subtract_kernel,
            out_shape=jax.ShapeDtypeStruct((rows, _LANE), out_dtype),
            grid=(num_blocks,),
            in_specs=[pl.BlockSpec(memory_space=pltpu.MemorySpace.SMEM),
                      pl.BlockSpec((_BLOCK_ROWS, _LANE), lambda i: (i, 0))],
            out_specs=pl.BlockSpec((_BLOCK_ROWS, _LANE), lambda i: (i, 0)),
            compiler_params=pltpu.CompilerParams(
                dimension_semantics=("parallel",),
                vmem_limit_bytes=vmem_limit),
        )(mean, x2d)

    out_flat = out2d.reshape(-1)
    if rem:
        out_flat = out_flat[:n]
    return out_flat.reshape(orig_shape)


if __name__ == "__main__":
    k1, k2, k3 = jax.random.split(jax.random.PRNGKey(0), 3)

    # Small NCHW input implied by the module -> fused single-block path.
    x_small = jax.random.normal(k1, (2, 4, 16, 16), dtype=jnp.float32)
    out_small = jax.block_until_ready(my_layer(x_small))
    ref_small = x_small - jnp.mean(x_small)
    assert out_small.shape == x_small.shape and out_small.dtype == x_small.dtype
    assert jnp.allclose(out_small, ref_small, atol=1e-5, rtol=1e-5)

    # Non-lane-aligned size -> exercises the pad / slice handling (fused path).
    x_odd = jax.random.normal(k2, (3, 5, 7, 11), dtype=jnp.float32)
    out_odd = jax.block_until_ready(my_layer(x_odd))
    ref_odd = x_odd - jnp.mean(x_odd)
    assert out_odd.shape == x_odd.shape and out_odd.dtype == x_odd.dtype
    assert jnp.allclose(out_odd, ref_odd, atol=1e-5, rtol=1e-5)

    # 48 MiB input -> exceeds the fused cap on every generation, exercising the
    # tiled two-pass (parallel partial-sum + parallel subtract) path.
    x_big = jax.random.normal(k3, (12, 1024, 1024), dtype=jnp.float32)
    out_big = jax.block_until_ready(my_layer(x_big))
    ref_big = x_big - jnp.mean(x_big)
    assert out_big.shape == x_big.shape and out_big.dtype == x_big.dtype
    assert jnp.allclose(out_big, ref_big, atol=1e-5, rtol=1e-5)

    print("KERNEL_OK")
</pallas_src>

<mosaic_0001>
module attributes {stable_mosaic.version = 11 : i64} {
  func.func @_fused_kernel(%arg0: memref<4x512xf32, #tpu.memory_space<vmem>>, %arg1: memref<4x512xf32, #tpu.memory_space<vmem>>) attributes {dimension_semantics = [], scalar_prefetch = 0 : i64, scratch_operands = 0 : i64, tpu.core_type = #tpu.core_type<tc>} {
    %c0 = arith.constant 0 : index
    %c0_0 = arith.constant 0 : index
    %0 = vector.load %arg0[%c0, %c0_0] : memref<4x512xf32, #tpu.memory_space<vmem>>, vector<4x512xf32>
    %cst = arith.constant dense<0.000000e+00> : vector<4xf32>
    %1 = vector.multi_reduction <add>, %0, %cst [1] : vector<4x512xf32> to vector<4xf32>
    %2 = vector.shape_cast %1 : vector<4xf32> to vector<4x1xf32>
    %cst_1 = arith.constant dense<0.000000e+00> : vector<1xf32>
    %3 = vector.multi_reduction <add>, %2, %cst_1 [0] : vector<4x1xf32> to vector<1xf32>
    %4 = vector.shape_cast %3 : vector<1xf32> to vector<1x1xf32>
    %cst_2 = arith.constant 4.8828125E-4 : f32
    %5 = vector.broadcast %cst_2 : f32 to vector<1x1xf32>
    %6 = arith.mulf %4, %5 : vector<1x1xf32>
    %7 = vector.broadcast %6 : vector<1x1xf32> to vector<4x512xf32>
    %8 = arith.subf %0, %7 : vector<4x512xf32>
    %c0_3 = arith.constant 0 : index
    %c0_4 = arith.constant 0 : index
    %9 = vector.load %arg1[%c0_3, %c0_4] : memref<4x512xf32, #tpu.memory_space<vmem>>, vector<4x512xf32>
    tpu.vector_store %arg1[%c0_3, %c0_4], %8 {strides = array<i32>} : memref<4x512xf32, #tpu.memory_space<vmem>>, vector<4x512xf32>,
    return
  }
}

</mosaic_0001>

<llo_original>
// kernel: my_layer.1
$region0: #{my_layer.1}
  #allocation0 [shape = 'u32[]', space=smem, size = 0x4, offset = 0x4, fixed_abs, tag = 'smem constant byte address 0x4 - core index']
  #allocation1 [shape = 'u32[144,128]{1,0:T(1,128)}', space=vmem, size = 0x12000, scoped, tag = 'internal scratch']
  %s0 = inlined_call_operand.vmem [shape: f32[4,512], index: 0, kind: input, shape index: {}]
  %s1 = inlined_call_operand.vmem [shape: f32[4,512], index: 1, kind: output, shape index: {}]
  %s2 = sld [smem:[#allocation0]]
  $region14: #{my_layer.1} parent=0
    _
  %s4 = ssub.s32 1, %s2
  %s5 = scalar_select 0, %s4, %s2
  // Predicated region
  $region2: #{my_layer.1} parent=0 // pred_check
    _
  $region3: #{my_layer.1} parent=0 // pred_check_branch
    %7 = sbr.rel (0) target = $region5
  $region4: #{my_layer.1} parent=0 // pred_region
    _
  $region5: #{my_layer.1} parent=0 // pred_fallthru
    _
  %v8 = vld [vmem:[%s0] sm:$0xff]
  %v9 = vld [vmem:[%s0 + $0x8] sm:$0xff]
  %v12 = vcombine.high %v8, %v8
  %v13 = vcombine.high %v9, %v9
  %vm16 = vcmask 1043456
  %v17 = vsel %vm16, %v8, 0.0
  %v18 = vsel %vm16, %v12, 0.0
  %v19 = vadd.f32 %v17, %v18
  %v20 = vsel %vm16, %v9, 0.0
  %v21 = vadd.f32 %v19, %v20
  %v22 = vsel %vm16, %v13, 0.0
  %v23 = vadd.f32 %v21, %v22
  %24 = vadd.xlane.f32.xlu0 %v23
  %v25 = vpop.xlane.xlu0 %24
  %v26 = vsel %vm16, %v25, 0.0
  %v27 = vrot.slane %v26, 4
  %v28 = vadd.f32 %v26, %v27
  %v29 = vrot.slane %v28, 2
  %v30 = vadd.f32 %v28, %v29
  %v31 = vrot.slane %v30, 1
  %v32 = vadd.f32 %v30, %v31
  %v33 = vmul.f32 %v32, 0.00048828125
  %v34 = vsub.f32 %v8, %v33
  %v35 = vsub.f32 %v9, %v33
  %36 = vst [vmem:[%s1] sm:$0xff] %v34
  %37 = vst [vmem:[%s1 + $0x8] sm:$0xff] %v35
  // Predicated region
  $region6: #{my_layer.1} parent=0 // pred_check
    _
  $region7: #{my_layer.1} parent=0 // pred_check_branch
    %39 = sbr.rel (0) target = $region9
  $region8: #{my_layer.1} parent=0 // pred_region
    _
  $region9: #{my_layer.1} parent=0 // pred_fallthru
    _
  // Predicated region
  $region10: #{my_layer.1} parent=0 // pred_check
    _
  $region11: #{my_layer.1} parent=0 // pred_check_branch
    %41 = sbr.rel (0) target = $region13
  $region12: #{my_layer.1} parent=0 // pred_region
    _
  $region13: #{my_layer.1} parent=0 // pred_fallthru
    _

</llo_original>
